<compile_context>
chip_gen: v7x
topology: tpu7x:2x2x1
jax: 0.10.0
libtpu: 0.0.40
codegen_flags: <defaults>
</compile_context>

<pallas_src>
import jax
import jax.numpy as jnp
from jax.experimental import pallas as pl
from jax.experimental.pallas import tpu as pltpu


_PACK = 4                    # rows packed per 128-lane row (4 * 32 = 128 lanes)
_SMALL_PACKED_ROWS = 2048    # <= ~1 MiB of packed x  ->  single no-grid call
_TARGET_TILE_PACKED = 2048   # ~1 MiB of packed x per grid step
_MIN_GRID_STEPS = 8          # v7x: 2 TCs, want >= ~4 pipelined steps per core


def _res_subnet_kernel(x_ref, w1_ref, b1_ref, w2_ref, b2_ref, a_ref, sel_ref, out_ref):
    x = x_ref[...]                                            # (T, 128) packed rows
    # fc1 + ReLU  (block-diagonal packed weight == per-32-lane-segment x @ W1^T)
    h = jnp.dot(x, w1_ref[...], preferred_element_type=jnp.float32) + b1_ref[...]
    h = jnp.maximum(h, 0.0)
    # fc2 + ReLU
    h = jnp.dot(h, w2_ref[...], preferred_element_type=jnp.float32) + b2_ref[...]
    h = jnp.maximum(h, 0.0)
    # expand per-row angles (T, 4) across their 32-lane segments via a 0/1 selector matmul
    ang = jnp.dot(a_ref[...], sel_ref[...], preferred_element_type=jnp.float32)
    # angle * res + residual input
    out_ref[...] = (ang * h + x).astype(out_ref.dtype)


def prepare_params(w1, b1, w2, b2, pack=_PACK):
    """One-time parameter prep (hoisted out of the per-call path).

    PyTorch nn.Linear stores weight as (F_out, F_in); we want x @ W^T.  On top of the
    transpose we lane-pack `pack` batch rows per 128-lane row by building block-diagonal
    weights kron(I_pack, W^T) and tiled biases, plus a (pack, pack*F) 0/1 selector used
    to expand per-row angles inside the kernel.
    """
    F = w1.shape[0]
    eye = jnp.eye(pack, dtype=w1.dtype)
    w1p = jnp.kron(eye, jnp.transpose(w1))                    # (pack*F, pack*F)
    w2p = jnp.kron(eye, jnp.transpose(w2))                    # (pack*F, pack*F)
    b1p = jnp.tile(b1, pack).reshape(1, pack * F)             # (1, pack*F)
    b2p = jnp.tile(b2, pack).reshape(1, pack * F)             # (1, pack*F)
    sel = jnp.kron(eye, jnp.ones((1, F), w1.dtype))           # (pack, pack*F)
    return w1p, b1p, w2p, b2p, sel


def res_subnet_forward(x, params, angle, *, batch_tile=None):
    """x: (B, F); params: output of prepare_params; angle: (B,).

    batch_tile (static): rows of the ORIGINAL batch per grid step; None -> auto.
    """
    w1p, b1p, w2p, b2p, sel = params
    B, F = x.shape
    pack = sel.shape[0]
    PF = pack * F                                             # 128 lanes

    # Pad the batch to a multiple of the packing factor (usually a no-op).
    pad = (-B) % pack
    if pad:
        x = jnp.pad(x, ((0, pad), (0, 0)))
        angle = jnp.pad(angle, ((0, pad),))
    bp = x.shape[0] // pack                                   # packed row count

    xp = x.reshape(bp, PF)                                    # metadata-only reshape
    ap = angle.reshape(bp, pack)                              # packed angles (bp, 4)

    # Tile selection: ~1 MiB of packed x per step, but keep >= _MIN_GRID_STEPS steps.
    if batch_tile is not None:
        tbp = max(8, (pl.cdiv(batch_tile, pack) // 8) * 8)
    else:
        tbp = min(_TARGET_TILE_PACKED,
                  max(8, (pl.cdiv(bp, _MIN_GRID_STEPS) // 8) * 8))

    use_grid = (batch_tile is not None) or (bp > _SMALL_PACKED_ROWS)

    if not use_grid:
        # Small batch: single grid-less call, every operand whole-array resident in VMEM
        # (<= ~2.3 MiB total -> safely inside default scoped VMEM on v5e/v6e/v7x).
        vmem = pl.BlockSpec(memory_space=pltpu.MemorySpace.VMEM)
        outp = pl.pallas_call(
            _res_subnet_kernel,
            out_shape=jax.ShapeDtypeStruct((bp, PF), x.dtype),
            in_specs=[vmem] * 7,
            out_specs=vmem,
        )(xp, w1p, b1p, w2p, b2p, ap, sel)
    else:
        # Large batch: stream lane-dense (tbp, 128) tiles of x/angle/out through a
        # pipelined grid; keep the packed weights / biases / selector VMEM-resident.
        grid = (pl.cdiv(bp, tbp),)
        outp = pl.pallas_call(
            _res_subnet_kernel,
            out_shape=jax.ShapeDtypeStruct((bp, PF), x.dtype),
            grid=grid,
            in_specs=[
                pl.BlockSpec((tbp, PF), lambda i: (i, 0)),    # x packed   (streamed)
                pl.BlockSpec((PF, PF), lambda i: (0, 0)),     # W1 packed  (resident)
                pl.BlockSpec((1, PF), lambda i: (0, 0)),      # b1 packed  (resident)
                pl.BlockSpec((PF, PF), lambda i: (0, 0)),     # W2 packed  (resident)
                pl.BlockSpec((1, PF), lambda i: (0, 0)),      # b2 packed  (resident)
                pl.BlockSpec((tbp, pack), lambda i: (i, 0)),  # angle pack (streamed)
                pl.BlockSpec((pack, PF), lambda i: (0, 0)),   # selector   (resident)
            ],
            out_specs=pl.BlockSpec((tbp, PF), lambda i: (i, 0)),
            compiler_params=pltpu.CompilerParams(
                dimension_semantics=("parallel",)),           # v7x: shard batch over 2 TCs
        )(xp, w1p, b1p, w2p, b2p, ap, sel)

    out = outp.reshape(bp * pack, F)
    return out[:B] if pad else out


def reference_forward(x, w1, b1, w2, b2, angle):
    h = jnp.maximum(x @ w1.T + b1, 0.0)
    h = jnp.maximum(h @ w2.T + b2, 0.0)
    return angle[:, None] * h + x


if __name__ == "__main__":
    F = 32   # feat_size

    key = jax.random.PRNGKey(0)
    k_w1, k_b1, k_w2, k_b2, k_x, k_a, k_x2, k_a2 = jax.random.split(key, 8)

    # Deterministic parameter init (mimics nn.Linear's uniform(-1/sqrt(F), 1/sqrt(F))).
    bound = 1.0 / (F ** 0.5)
    w1 = jax.random.uniform(k_w1, (F, F), jnp.float32, -bound, bound)
    b1 = jax.random.uniform(k_b1, (F,), jnp.float32, -bound, bound)
    w2 = jax.random.uniform(k_w2, (F, F), jnp.float32, -bound, bound)
    b2 = jax.random.uniform(k_b2, (F,), jnp.float32, -bound, bound)

    params = prepare_params(w1, b1, w2, b2)   # one-time prep, outside the call path
    fwd = jax.jit(res_subnet_forward, static_argnames=("batch_tile",))

    # --- small batch: packed, single grid-less call ---
    B = 8
    x = jax.random.normal(k_x, (B, F), jnp.float32)
    angle = jax.random.normal(k_a, (B,), jnp.float32)

    out = fwd(x, params, angle)
    jax.block_until_ready(out)
    ref = reference_forward(x, w1, b1, w2, b2, angle)
    assert out.shape == (B, F)
    assert jnp.allclose(out, ref, atol=1e-4, rtol=1e-4), \
        float(jnp.max(jnp.abs(out - ref)))

    # --- ragged batch (not a multiple of 4 nor of the tile): pipelined grid path,
    #     pl.cdiv grid with a masked partial last tile, weights resident ---
    B2 = 1002
    x2 = jax.random.normal(k_x2, (B2, F), jnp.float32)
    angle2 = jax.random.normal(k_a2, (B2,), jnp.float32)

    out2 = fwd(x2, params, angle2, batch_tile=256)   # 64 packed rows/tile -> 4 grid steps
    jax.block_until_ready(out2)
    ref2 = reference_forward(x2, w1, b1, w2, b2, angle2)
    assert out2.shape == (B2, F)
    assert jnp.allclose(out2, ref2, atol=1e-4, rtol=1e-4), \
        float(jnp.max(jnp.abs(out2 - ref2)))

    print("KERNEL_OK")
</pallas_src>

<mosaic_0001>
module attributes {stable_mosaic.version = 11 : i64} {
  func.func @_res_subnet_kernel(%arg0: memref<2x128xf32, #tpu.memory_space<vmem>>, %arg1: memref<128x128xf32, #tpu.memory_space<vmem>>, %arg2: memref<1x128xf32, #tpu.memory_space<vmem>>, %arg3: memref<128x128xf32, #tpu.memory_space<vmem>>, %arg4: memref<1x128xf32, #tpu.memory_space<vmem>>, %arg5: memref<2x4xf32, #tpu.memory_space<vmem>>, %arg6: memref<4x128xf32, #tpu.memory_space<vmem>>, %arg7: memref<2x128xf32, #tpu.memory_space<vmem>>) attributes {dimension_semantics = [], scalar_prefetch = 0 : i64, scratch_operands = 0 : i64, tpu.core_type = #tpu.core_type<tc>} {
    %c0 = arith.constant 0 : index
    %c0_0 = arith.constant 0 : index
    %0 = vector.load %arg0[%c0, %c0_0] : memref<2x128xf32, #tpu.memory_space<vmem>>, vector<2x128xf32>
    %c0_1 = arith.constant 0 : index
    %c0_2 = arith.constant 0 : index
    %1 = vector.load %arg1[%c0_1, %c0_2] : memref<128x128xf32, #tpu.memory_space<vmem>>, vector<128x128xf32>
    %cst = arith.constant dense<0.000000e+00> : vector<2x128xf32>
    %2 = tpu.matmul %0, %1, %cst {dimension_numbers = #tpu.dot_dimension_numbers<[1], [0], [0], [1], [0, 0, 1, 1], [], []>} : vector<2x128xf32>, vector<128x128xf32>, vector<2x128xf32> -> vector<2x128xf32>
    %c0_3 = arith.constant 0 : index
    %c0_4 = arith.constant 0 : index
    %3 = vector.load %arg2[%c0_3, %c0_4] : memref<1x128xf32, #tpu.memory_space<vmem>>, vector<1x128xf32>
    %4 = vector.broadcast %3 : vector<1x128xf32> to vector<2x128xf32>
    %5 = arith.addf %2, %4 : vector<2x128xf32>
    %cst_5 = arith.constant 0.000000e+00 : f32
    %6 = vector.broadcast %cst_5 : f32 to vector<2x128xf32>
    %7 = arith.maximumf %5, %6 : vector<2x128xf32>
    %c0_6 = arith.constant 0 : index
    %c0_7 = arith.constant 0 : index
    %8 = vector.load %arg3[%c0_6, %c0_7] : memref<128x128xf32, #tpu.memory_space<vmem>>, vector<128x128xf32>
    %cst_8 = arith.constant dense<0.000000e+00> : vector<2x128xf32>
    %9 = tpu.matmul %7, %8, %cst_8 {dimension_numbers = #tpu.dot_dimension_numbers<[1], [0], [0], [1], [0, 0, 1, 1], [], []>} : vector<2x128xf32>, vector<128x128xf32>, vector<2x128xf32> -> vector<2x128xf32>
    %c0_9 = arith.constant 0 : index
    %c0_10 = arith.constant 0 : index
    %10 = vector.load %arg4[%c0_9, %c0_10] : memref<1x128xf32, #tpu.memory_space<vmem>>, vector<1x128xf32>
    %11 = vector.broadcast %10 : vector<1x128xf32> to vector<2x128xf32>
    %12 = arith.addf %9, %11 : vector<2x128xf32>
    %cst_11 = arith.constant 0.000000e+00 : f32
    %13 = vector.broadcast %cst_11 : f32 to vector<2x128xf32>
    %14 = arith.maximumf %12, %13 : vector<2x128xf32>
    %c0_12 = arith.constant 0 : index
    %c0_13 = arith.constant 0 : index
    %15 = vector.load %arg5[%c0_12, %c0_13] : memref<2x4xf32, #tpu.memory_space<vmem>>, vector<2x4xf32>
    %c0_14 = arith.constant 0 : index
    %c0_15 = arith.constant 0 : index
    %16 = vector.load %arg6[%c0_14, %c0_15] : memref<4x128xf32, #tpu.memory_space<vmem>>, vector<4x128xf32>
    %cst_16 = arith.constant dense<0.000000e+00> : vector<2x128xf32>
    %17 = tpu.matmul %15, %16, %cst_16 {dimension_numbers = #tpu.dot_dimension_numbers<[1], [0], [0], [1], [0, 0, 1, 1], [], []>} : vector<2x4xf32>, vector<4x128xf32>, vector<2x128xf32> -> vector<2x128xf32>
    %18 = arith.mulf %17, %14 : vector<2x128xf32>
    %19 = arith.addf %18, %0 : vector<2x128xf32>
    %c0_17 = arith.constant 0 : index
    %c0_18 = arith.constant 0 : index
    %20 = vector.load %arg7[%c0_17, %c0_18] : memref<2x128xf32, #tpu.memory_space<vmem>>, vector<2x128xf32>
    tpu.vector_store %arg7[%c0_17, %c0_18], %19 {strides = array<i32>} : memref<2x128xf32, #tpu.memory_space<vmem>>, vector<2x128xf32>,
    return
  }
}

</mosaic_0001>

<llo_original>
// kernel: res_subnet_forward.1
$region0: #{res_subnet_forward.1}
  #allocation0 [shape = 'u32[]', space=smem, size = 0x4, offset = 0x4, fixed_abs, tag = 'smem constant byte address 0x4 - core index']
  #allocation1 [shape = 'u32[144,128]{1,0:T(1,128)}', space=vmem, size = 0x12000, scoped, tag = 'internal scratch']
  %s0 = inlined_call_operand.vmem [shape: f32[2,128], index: 0, kind: input, shape index: {}]
  %s1 = inlined_call_operand.hbm [shape: f32[128,128], index: 1, kind: input, shape index: {}]
  %s2 = inlined_call_operand.vmem [shape: f32[1,128], index: 2, kind: input, shape index: {}]
  %s3 = inlined_call_operand.hbm [shape: f32[128,128], index: 3, kind: input, shape index: {}]
  %s4 = inlined_call_operand.vmem [shape: f32[1,128], index: 4, kind: input, shape index: {}]
  %s5 = inlined_call_operand.vmem [shape: f32[2,4], index: 5, kind: input, shape index: {}]
  %s6 = inlined_call_operand.vmem [shape: f32[4,128], index: 6, kind: input, shape index: {}]
  %s7 = inlined_call_operand.vmem [shape: f32[2,128], index: 7, kind: output, shape index: {}]
  %s8 = sld [smem:[#allocation0]]
  $region46: #{res_subnet_forward.1} parent=0
    _
  %s10 = ssub.s32 1, %s8
  %s11 = scalar_select 0, %s10, %s8
  $region1: #{res_subnet_forward.1} parent=0
    #allocation2 [shape = 'u8[65536]{0}', space=vmem, size = 0x10000, scoped, tag = 'input window, operand 1, single buffered']
    #allocation3 [shape = 's32[1]{0}', space=sflag, size = 0x4, scoped, tag = 'scoped memory for res_subnet_forward.1']
    #allocation4 [shape = 'u8[65536]{0}', space=vmem, size = 0x10000, scoped, tag = 'input window, operand 3, single buffered']
    #allocation5 [shape = 's32[1]{0}', space=sflag, size = 0x4, scoped, tag = 'scoped memory for res_subnet_forward.1']
    %12 = vsyncpa [#allocation3], 0
    %13 = vsyncpa [#allocation5], 0
    // Predicated region
    $region2: #{res_subnet_forward.1} parent=1 // pred_check
      _
    $region3: #{res_subnet_forward.1} parent=1 // pred_check_branch
      %15 = sbr.rel (0) target = $region5
    $region4: #{res_subnet_forward.1} parent=1 // pred_region
      _
    $region5: #{res_subnet_forward.1} parent=1 // pred_fallthru
      _
    // Predicated region
    $region6: #{res_subnet_forward.1} parent=1 // pred_check
      _
    $region7: #{res_subnet_forward.1} parent=1 // pred_check_branch
      %17 = sbr.rel (0) target = $region9
    $region8: #{res_subnet_forward.1} parent=1 // pred_region
      %s19 = ssub.s32 2048, 2048
      %20 = vsyncadd [#allocation3], %s19
      %s21 = sshll.u32 [#allocation2], 4
      %s22 = int_to_ptr.vmem [resolvable:$true] %s21
      %27 = dma.hbm_to_vmem [thread:$0]  %s1, 2048, %s22, [#allocation3], 128, 128, 8
    $region9: #{res_subnet_forward.1} parent=1 // pred_fallthru
      _
    // Predicated region
    $region10: #{res_subnet_forward.1} parent=1 // pred_check
      _
    $region11: #{res_subnet_forward.1} parent=1 // pred_check_branch
      %29 = sbr.rel (0) target = $region13
    $region12: #{res_subnet_forward.1} parent=1 // pred_region
      _
    $region13: #{res_subnet_forward.1} parent=1 // pred_fallthru
      _
    // Predicated region
    $region14: #{res_subnet_forward.1} parent=1 // pred_check
      _
    $region15: #{res_subnet_forward.1} parent=1 // pred_check_branch
      %31 = sbr.rel (0) target = $region17
    $region16: #{res_subnet_forward.1} parent=1 // pred_region
      %s33 = ssub.s32 2048, 2048
      %34 = vsyncadd [#allocation5], %s33
      %s35 = sshll.u32 [#allocation4], 4
      %s36 = int_to_ptr.vmem [resolvable:$true] %s35
      %41 = dma.hbm_to_vmem [thread:$0]  %s3, 2048, %s36, [#allocation5], 128, 128, 8
    $region17: #{res_subnet_forward.1} parent=1 // pred_fallthru
      _
    // Predicated region
    $region18: #{res_subnet_forward.1} parent=1 // pred_check
      _
    $region19: #{res_subnet_forward.1} parent=1 // pred_check_branch
      %43 = sbr.rel (0) target = $region21
    $region20: #{res_subnet_forward.1} parent=1 // pred_region
      _
    $region21: #{res_subnet_forward.1} parent=1 // pred_fallthru
      _
    // Predicated region
    $region22: #{res_subnet_forward.1} parent=1 // pred_check
      _
    $region23: #{res_subnet_forward.1} parent=1 // pred_check_branch
      %45 = sbr.rel (0) target = $region25
    $region24: #{res_subnet_forward.1} parent=1 // pred_region
      _
    $region25: #{res_subnet_forward.1} parent=1 // pred_fallthru
      _
    // Predicated region
    $region26: #{res_subnet_forward.1} parent=1 // pred_check
      _
    $region27: #{res_subnet_forward.1} parent=1 // pred_check_branch
      %47 = sbr.rel (0) target = $region29
    $region28: #{res_subnet_forward.1} parent=1 // pred_region
      _
    $region29: #{res_subnet_forward.1} parent=1 // pred_fallthru
      _
    // Predicated region
    $region30: #{res_subnet_forward.1} parent=1 // pred_check
      _
    $region31: #{res_subnet_forward.1} parent=1 // pred_check_branch
      %49 = sbr.rel (0) target = $region33
    $region32: #{res_subnet_forward.1} parent=1 // pred_region
      %50 = dma.done [#allocation3], 2048
    $region33: #{res_subnet_forward.1} parent=1 // pred_fallthru
      _
    // Predicated region
    $region34: #{res_subnet_forward.1} parent=1 // pred_check
      _
    $region35: #{res_subnet_forward.1} parent=1 // pred_check_branch
      %52 = sbr.rel (0) target = $region37
    $region36: #{res_subnet_forward.1} parent=1 // pred_region
      %53 = dma.done [#allocation5], 2048
    $region37: #{res_subnet_forward.1} parent=1 // pred_fallthru
      _
    %v54 = vld [vmem:[%s0] sm:$0x3]
    %v55 = vld [vmem:[#allocation2] sm:$0xff]
    %v56 = vld [vmem:[#allocation2 + $0x8] sm:$0xff]
    %v57 = vld [vmem:[#allocation2 + $0x10] sm:$0xff]
    %v58 = vld [vmem:[#allocation2 + $0x18] sm:$0xff]
    %v59 = vld [vmem:[#allocation2 + $0x20] sm:$0xff]
    %v60 = vld [vmem:[#allocation2 + $0x28] sm:$0xff]
    %v61 = vld [vmem:[#allocation2 + $0x30] sm:$0xff]
    %v62 = vld [vmem:[#allocation2 + $0x38] sm:$0xff]
    %v63 = vld [vmem:[#allocation2 + $0x40] sm:$0xff]
    %v64 = vld [vmem:[#allocation2 + $0x48] sm:$0xff]
    %v65 = vld [vmem:[#allocation2 + $0x50] sm:$0xff]
    %v66 = vld [vmem:[#allocation2 + $0x58] sm:$0xff]
    %v67 = vld [vmem:[#allocation2 + $0x60] sm:$0xff]
    %v68 = vld [vmem:[#allocation2 + $0x68] sm:$0xff]
    %v69 = vld [vmem:[#allocation2 + $0x70] sm:$0xff]
    %v70 = vld [vmem:[#allocation2 + $0x78] sm:$0xff]
    %v71 = vld [vmem:[%s2] sm:$0x1]
    %v73 = vlaneseq
    %v74 = vshrl.u32 %v73, 7
    %v75 = vsub.s32 0, %v74
    %v76 = vrot.slane %v71, %v75
    %78 = vmatprep.subr.mxu0 0.0
    %79 = vmatpush1.msra.mxu0 %v55
    %80 = vmatprep.subr.mxu0 0.0
    %81 = vmatpush1.msra.mxu0 %v56
    %82 = vmatprep.subr.mxu0 0.0
    %83 = vmatpush1.msra.mxu0 %v57
    %84 = vmatprep.subr.mxu0 0.0
    %85 = vmatpush1.msra.mxu0 %v58
    %86 = vmatprep.subr.mxu0 0.0
    %87 = vmatpush1.msra.mxu0 %v59
    %88 = vmatprep.subr.mxu0 0.0
    %89 = vmatpush1.msra.mxu0 %v60
    %90 = vmatprep.subr.mxu0 0.0
    %91 = vmatpush1.msra.mxu0 %v61
    %92 = vmatprep.subr.mxu0 0.0
    %93 = vmatpush1.msra.mxu0 %v62
    %94 = vmatprep.subr.mxu0 0.0
    %95 = vmatpush1.msra.mxu0 %v63
    %96 = vmatprep.subr.mxu0 0.0
    %97 = vmatpush1.msra.mxu0 %v64
    %98 = vmatprep.subr.mxu0 0.0
    %99 = vmatpush1.msra.mxu0 %v65
    %100 = vmatprep.subr.mxu0 0.0
    %101 = vmatpush1.msra.mxu0 %v66
    %102 = vmatprep.subr.mxu0 0.0
    %103 = vmatpush1.msra.mxu0 %v67
    %104 = vmatprep.subr.mxu0 0.0
    %105 = vmatpush1.msra.mxu0 %v68
    %106 = vmatprep.subr.mxu0 0.0
    %107 = vmatpush1.msra.mxu0 %v69
    %108 = vmatprep.subr.mxu0 0.0
    %109 = vmatpush1.msra.mxu0 %v70
    %110 = vmatprep.subr.mxu0 0.0
    %111 = vmatpush1.msra.mxu0 0.0
    %112 = vmatprep.subr.mxu0 0.0
    %113 = vmatpush1.msra.mxu0 0.0
    %114 = vmatprep.subr.mxu0 0.0
    %115 = vmatpush1.msra.mxu0 0.0
    %116 = vmatprep.subr.mxu0 0.0
    %117 = vmatpush1.msra.mxu0 0.0
    %118 = vmatprep.subr.mxu0 0.0
    %119 = vmatpush1.msra.mxu0 0.0
    %120 = vmatprep.subr.mxu0 0.0
    %121 = vmatpush1.msra.mxu0 0.0
    %122 = vmatprep.subr.mxu0 0.0
    %123 = vmatpush1.msra.mxu0 0.0
    %124 = vmatprep.subr.mxu0 0.0
    %125 = vmatpush1.msra.mxu0 0.0
    %126 = vmatprep.subr.mxu0 0.0
    %127 = vmatpush1.msra.mxu0 0.0
    %128 = vmatprep.subr.mxu0 0.0
    %129 = vmatpush1.msra.mxu0 0.0
    %130 = vmatprep.subr.mxu0 0.0
    %131 = vmatpush1.msra.mxu0 0.0
    %132 = vmatprep.subr.mxu0 0.0
    %133 = vmatpush1.msra.mxu0 0.0
    %134 = vmatprep.subr.mxu0 0.0
    %135 = vmatpush1.msra.mxu0 0.0
    %136 = vmatprep.subr.mxu0 0.0
    %137 = vmatpush1.msra.mxu0 0.0
    %138 = vmatprep.subr.mxu0 0.0
    %139 = vmatpush1.msra.mxu0 0.0
    %140 = vmatprep.subr.mxu0 0.0
    %141 = vmatpush1.msra.mxu0 0.0
    %142 = vmatprep.mubr.f32.mxu0 0.0
    %143 = vmatmul.mubr.f32.gmra.mrb[0].mxu0 %v54
    %v144 = vpop.f32.mrb[0].mxu0
    %v145 = vadd.f32 %v76, %v144
    %v146 = vpop.f32.mrb[0].mxu0
    %147 = vdwg.mxu0
    %v148 = vmax.f32 %v145, 0.0
    %v149 = vld [vmem:[#allocation4] sm:$0xff]
    %v150 = vld [vmem:[#allocation4 + $0x8] sm:$0xff]
    %v151 = vld [vmem:[#allocation4 + $0x10] sm:$0xff]
    %v152 = vld [vmem:[#allocation4 + $0x18] sm:$0xff]
    %v153 = vld [vmem:[#allocation4 + $0x20] sm:$0xff]
    %v154 = vld [vmem:[#allocation4 + $0x28] sm:$0xff]
    %v155 = vld [vmem:[#allocation4 + $0x30] sm:$0xff]
    %v156 = vld [vmem:[#allocation4 + $0x38] sm:$0xff]
    %v157 = vld [vmem:[#allocation4 + $0x40] sm:$0xff]
    %v158 = vld [vmem:[#allocation4 + $0x48] sm:$0xff]
    %v159 = vld [vmem:[#allocation4 + $0x50] sm:$0xff]
    %v160 = vld [vmem:[#allocation4 + $0x58] sm:$0xff]
    %v161 = vld [vmem:[#allocation4 + $0x60] sm:$0xff]
    %v162 = vld [vmem:[#allocation4 + $0x68] sm:$0xff]
    %v163 = vld [vmem:[#allocation4 + $0x70] sm:$0xff]
    %v164 = vld [vmem:[#allocation4 + $0x78] sm:$0xff]
    %v165 = vld [vmem:[%s4] sm:$0x1]
    %v167 = vlaneseq
    %v168 = vshrl.u32 %v167, 7
    %v169 = vsub.s32 0, %v168
    %v170 = vrot.slane %v165, %v169
    %172 = vmatprep.subr.mxu0 0.0
    %173 = vmatpush1.msra.mxu0 %v149
    %174 = vmatprep.subr.mxu0 0.0
    %175 = vmatpush1.msra.mxu0 %v150
    %176 = vmatprep.subr.mxu0 0.0
    %177 = vmatpush1.msra.mxu0 %v151
    %178 = vmatprep.subr.mxu0 0.0
    %179 = vmatpush1.msra.mxu0 %v152
    %180 = vmatprep.subr.mxu0 0.0
    %181 = vmatpush1.msra.mxu0 %v153
    %182 = vmatprep.subr.mxu0 0.0
    %183 = vmatpush1.msra.mxu0 %v154
    %184 = vmatprep.subr.mxu0 0.0
    %185 = vmatpush1.msra.mxu0 %v155
    %186 = vmatprep.subr.mxu0 0.0
    %187 = vmatpush1.msra.mxu0 %v156
    %188 = vmatprep.subr.mxu0 0.0
    %189 = vmatpush1.msra.mxu0 %v157
    %190 = vmatprep.subr.mxu0 0.0
    %191 = vmatpush1.msra.mxu0 %v158
    %192 = vmatprep.subr.mxu0 0.0
    %193 = vmatpush1.msra.mxu0 %v159
    %194 = vmatprep.subr.mxu0 0.0
    %195 = vmatpush1.msra.mxu0 %v160
    %196 = vmatprep.subr.mxu0 0.0
    %197 = vmatpush1.msra.mxu0 %v161
    %198 = vmatprep.subr.mxu0 0.0
    %199 = vmatpush1.msra.mxu0 %v162
    %200 = vmatprep.subr.mxu0 0.0
    %201 = vmatpush1.msra.mxu0 %v163
    %202 = vmatprep.subr.mxu0 0.0
    %203 = vmatpush1.msra.mxu0 %v164
    %204 = vmatprep.subr.mxu0 0.0
    %205 = vmatpush1.msra.mxu0 0.0
    %206 = vmatprep.subr.mxu0 0.0
    %207 = vmatpush1.msra.mxu0 0.0
    %208 = vmatprep.subr.mxu0 0.0
    %209 = vmatpush1.msra.mxu0 0.0
    %210 = vmatprep.subr.mxu0 0.0
    %211 = vmatpush1.msra.mxu0 0.0
    %212 = vmatprep.subr.mxu0 0.0
    %213 = vmatpush1.msra.mxu0 0.0
    %214 = vmatprep.subr.mxu0 0.0
    %215 = vmatpush1.msra.mxu0 0.0
    %216 = vmatprep.subr.mxu0 0.0
    %217 = vmatpush1.msra.mxu0 0.0
    %218 = vmatprep.subr.mxu0 0.0
    %219 = vmatpush1.msra.mxu0 0.0
    %220 = vmatprep.subr.mxu0 0.0
    %221 = vmatpush1.msra.mxu0 0.0
    %222 = vmatprep.subr.mxu0 0.0
    %223 = vmatpush1.msra.mxu0 0.0
    %224 = vmatprep.subr.mxu0 0.0
    %225 = vmatpush1.msra.mxu0 0.0
    %226 = vmatprep.subr.mxu0 0.0
    %227 = vmatpush1.msra.mxu0 0.0
    %228 = vmatprep.subr.mxu0 0.0
    %229 = vmatpush1.msra.mxu0 0.0
    %230 = vmatprep.subr.mxu0 0.0
    %231 = vmatpush1.msra.mxu0 0.0
    %232 = vmatprep.subr.mxu0 0.0
    %233 = vmatpush1.msra.mxu0 0.0
    %234 = vmatprep.subr.mxu0 0.0
    %235 = vmatpush1.msra.mxu0 0.0
    %236 = vmatprep.mubr.f32.mxu0 0.0
    %237 = vmatmul.mubr.f32.gmra.mrb[0].mxu0 %v148
    %v238 = vpop.f32.mrb[0].mxu0
    %v239 = vadd.f32 %v170, %v238
    %v240 = vpop.f32.mrb[0].mxu0
    %241 = vdwg.mxu0
    %v242 = vmax.f32 %v239, 0.0
    %v243 = vld [vmem:[%s5] sm:$0x3]
    %v244 = vld [vmem:[%s6] sm:$0xf]
    %vm245 = vcmask 31744
    %v247 = vsel %vm245, %v243, 0
    %vm249 = vcmask 1043456
    %v251 = vsel %vm249, %v244, 0
    %253 = vmatprep.subr.mxu0 0.0
    %254 = vmatpush1.msra.mxu0 %v251
    %255 = vmatprep.subr.mxu0 0.0
    %256 = vmatpush1.msra.mxu0 0.0
    %257 = vmatprep.subr.mxu0 0.0
    %258 = vmatpush1.msra.mxu0 0.0
    %259 = vmatprep.subr.mxu0 0.0
    %260 = vmatpush1.msra.mxu0 0.0
    %261 = vmatprep.subr.mxu0 0.0
    %262 = vmatpush1.msra.mxu0 0.0
    %263 = vmatprep.subr.mxu0 0.0
    %264 = vmatpush1.msra.mxu0 0.0
    %265 = vmatprep.subr.mxu0 0.0
    %266 = vmatpush1.msra.mxu0 0.0
    %267 = vmatprep.subr.mxu0 0.0
    %268 = vmatpush1.msra.mxu0 0.0
    %269 = vmatprep.subr.mxu0 0.0
    %270 = vmatpush1.msra.mxu0 0.0
    %271 = vmatprep.subr.mxu0 0.0
    %272 = vmatpush1.msra.mxu0 0.0
    %273 = vmatprep.subr.mxu0 0.0
    %274 = vmatpush1.msra.mxu0 0.0
    %275 = vmatprep.subr.mxu0 0.0
    %276 = vmatpush1.msra.mxu0 0.0
    %277 = vmatprep.subr.mxu0 0.0
    %278 = vmatpush1.msra.mxu0 0.0
    %279 = vmatprep.subr.mxu0 0.0
    %280 = vmatpush1.msra.mxu0 0.0
    %281 = vmatprep.subr.mxu0 0.0
    %282 = vmatpush1.msra.mxu0 0.0
    %283 = vmatprep.subr.mxu0 0.0
    %284 = vmatpush1.msra.mxu0 0.0
    %285 = vmatprep.subr.mxu0 0.0
    %286 = vmatpush1.msra.mxu0 0.0
    %287 = vmatprep.subr.mxu0 0.0
    %288 = vmatpush1.msra.mxu0 0.0
    %289 = vmatprep.subr.mxu0 0.0
    %290 = vmatpush1.msra.mxu0 0.0
    %291 = vmatprep.subr.mxu0 0.0
    %292 = vmatpush1.msra.mxu0 0.0
    %293 = vmatprep.subr.mxu0 0.0
    %294 = vmatpush1.msra.mxu0 0.0
    %295 = vmatprep.subr.mxu0 0.0
    %296 = vmatpush1.msra.mxu0 0.0
    %297 = vmatprep.subr.mxu0 0.0
    %298 = vmatpush1.msra.mxu0 0.0
    %299 = vmatprep.subr.mxu0 0.0
    %300 = vmatpush1.msra.mxu0 0.0
    %301 = vmatprep.subr.mxu0 0.0
    %302 = vmatpush1.msra.mxu0 0.0
    %303 = vmatprep.subr.mxu0 0.0
    %304 = vmatpush1.msra.mxu0 0.0
    %305 = vmatprep.subr.mxu0 0.0
    %306 = vmatpush1.msra.mxu0 0.0
    %307 = vmatprep.subr.mxu0 0.0
    %308 = vmatpush1.msra.mxu0 0.0
    %309 = vmatprep.subr.mxu0 0.0
    %310 = vmatpush1.msra.mxu0 0.0
    %311 = vmatprep.subr.mxu0 0.0
    %312 = vmatpush1.msra.mxu0 0.0
    %313 = vmatprep.subr.mxu0 0.0
    %314 = vmatpush1.msra.mxu0 0.0
    %315 = vmatprep.subr.mxu0 0.0
    %316 = vmatpush1.msra.mxu0 0.0
    %317 = vmatprep.mubr.f32.mxu0 0.0
    %318 = vmatmul.mubr.f32.gmra.mrb[0].mxu0 %v247
    %v319 = vpop.f32.mrb[0].mxu0
    %v320 = vadd.f32 0.0, %v319
    %v321 = vpop.f32.mrb[0].mxu0
    %322 = vdwg.mxu0
    %v323 = vmul.f32 %v320, %v242
    %v324 = vadd.f32 %v323, %v54
    %325 = vst [vmem:[%s7] sm:$0x3] %v324
    // Predicated region
    $region38: #{res_subnet_forward.1} parent=1 // pred_check
      _
    $region39: #{res_subnet_forward.1} parent=1 // pred_check_branch
      %327 = sbr.rel (0) target = $region41
    $region40: #{res_subnet_forward.1} parent=1 // pred_region
      _
    $region41: #{res_subnet_forward.1} parent=1 // pred_fallthru
      _
    // Predicated region
    $region42: #{res_subnet_forward.1} parent=1 // pred_check
      _
    $region43: #{res_subnet_forward.1} parent=1 // pred_check_branch
      %329 = sbr.rel (0) target = $region45
    $region44: #{res_subnet_forward.1} parent=1 // pred_region
      _
    $region45: #{res_subnet_forward.1} parent=1 // pred_fallthru
      _
    %330 = vsyncpa [#allocation3], 1
    %331 = vsyncpa [#allocation5], 1

</llo_original>
